<compile_context>
chip_gen: v5e
topology: v5e:2x2
jax: 0.10.0
libtpu: 0.0.40
codegen_flags: <defaults>
</compile_context>

<pallas_src>
import jax
import jax.numpy as jnp
from jax import lax
from jax.experimental import pallas as pl
from jax.experimental.pallas import tpu as pltpu

EPS = 1e-5  # nn.BatchNorm2d default eps


# ---------------------------------------------------------------------------
# Fused Pallas kernel: conv1 -> BN1 -> ReLU -> conv2 -> BN2 -> +res -> ReLU
# ---------------------------------------------------------------------------
def _basic_block_kernel(x_ref, wbs1_ref, wbs2_ref, g1_ref, b1_ref,
                        g2_ref, b2_ref, fold2_ref, expand_ref, out_ref):
    N, H, WC = x_ref.shape                 # x: (N, H, W*C), lane-dense
    C = g1_ref.shape[-1]
    W = WC // C
    inv_count = 1.0 / float(N * H * W)     # BN normalizes over N*H*W

    x = x_ref[...]                                    # conv1 input AND residual
    zrow = jnp.zeros((N, 1, WC), jnp.float32)         # hoisted: shared by both convs
    ones_row = jnp.ones((1, N * H), jnp.float32)      # hoisted: BN reduce on MXU
    fold2 = fold2_ref[...]                            # (2*W*C, 2*C)
    expand = expand_ref[...]                          # (C, W*C)
    cdtype = wbs1_ref.dtype                           # MXU operand dtype (f32/bf16)

    def conv3x3_bn(src_3d, wbs_ref, g_ref, b_ref):
        # --- 3x3 conv as ONE banded matmul, K = 3*W*Cin ----------------------
        # Row windows r-1 / r / r+1 with the zero H-halo built in-register
        # (no scratch store->reload); the W halo is folded into the banded
        # weights so no width padding is ever materialized.
        up = jnp.concatenate([zrow, src_3d[:, :H - 1, :]], axis=1)   # row r-1
        dn = jnp.concatenate([src_3d[:, 1:, :], zrow], axis=1)       # row r+1
        stacked = jnp.concatenate([up, src_3d, dn], axis=-1)         # (N,H,3WC)
        stacked = stacked.reshape(N * H, 3 * WC).astype(cdtype)
        acc = jnp.dot(stacked, wbs_ref[...],
                      preferred_element_type=jnp.float32)            # (N*H, WC)

        # --- one-pass BN batch stats: fused [sum, sumsq] on the idle MXU -----
        cat = jnp.concatenate([acc, acc * acc], axis=-1)             # (N*H, 2WC)
        col = jnp.dot(ones_row, cat, preferred_element_type=jnp.float32)   # (1,2WC)
        stats = jnp.dot(col, fold2, preferred_element_type=jnp.float32)    # (1,2C)
        mean = stats[:, :C] * inv_count
        # TODO(synk): switch to a shifted / two-pass variance if production
        # activation scales make E[x^2]-E[x]^2 cancellation-prone.
        var = jnp.maximum(stats[:, C:] * inv_count - mean * mean, 0.0)
        scale_c = g_ref[...] * lax.rsqrt(var + EPS)                  # (1, C)
        shift_c = b_ref[...] - mean * scale_c                        # (1, C)
        # single matmul expands BOTH scale and shift back onto the lane layout
        lane = jnp.dot(jnp.concatenate([scale_c, shift_c], axis=0), expand,
                       preferred_element_type=jnp.float32)           # (2, WC)
        return acc * lane[0:1, :] + lane[1:2, :]                     # (N*H, WC)

    out1 = jnp.maximum(conv3x3_bn(x, wbs1_ref, g1_ref, b1_ref), 0.0)
    y2 = conv3x3_bn(out1.reshape(N, H, WC), wbs2_ref, g2_ref, b2_ref)
    out_ref[...] = jnp.maximum(y2 + x.reshape(N * H, WC), 0.0)


# ---------------------------------------------------------------------------
# Wrapper-side weight / layout preparation (done ONCE per block, not per call)
# ---------------------------------------------------------------------------
def _banded_weight_stacked(w_hwio, W):
    """(3,3,Cin,Cout) conv weights -> (3*W*Cin, W*Cout) K-stacked banded matrix.

    band(dh)[(w+dw-1)*Cin + ci, w*Cout + co] = w_hwio[dh, dw, ci, co]
    (taps falling outside [0, W) are absent => width zero-padding)."""
    kh, kw, Cin, Cout = w_hwio.shape
    mats = []
    for dh in range(kh):
        m = jnp.zeros((W * Cin, W * Cout), w_hwio.dtype)
        for dw in range(kw):
            d = jnp.eye(W, k=1 - dw, dtype=w_hwio.dtype)     # route w' = w+dw-1
            m = m + jnp.einsum("pq,io->piqo", d, w_hwio[dh, dw]).reshape(
                W * Cin, W * Cout)
        mats.append(m)
    return jnp.concatenate(mats, axis=0)                     # (3*W*Cin, W*Cout)


def prepare_basic_block(params, W, compute_dtype=jnp.float32):
    """Build static per-block constants once (outside the per-step path)."""
    C = params["w1"].shape[-1]
    WC = W * C
    if WC % 128 != 0:
        raise ValueError("lane-dense layout requires W*C to be a multiple of 128")
    if params["w1"].shape[2] != params["w1"].shape[3]:
        raise ValueError("stride-1 / no-downsample BasicBlock requires Cin == Cout")

    fold = jnp.tile(jnp.eye(C, dtype=jnp.float32), (W, 1))          # (W*C, C)
    fold2 = jnp.zeros((2 * WC, 2 * C), jnp.float32)
    fold2 = fold2.at[:WC, :C].set(fold).at[WC:, C:].set(fold)       # block-diag
    expand = jnp.tile(jnp.eye(C, dtype=jnp.float32), (1, W))        # (C, W*C)

    return {
        "wbs1": _banded_weight_stacked(params["w1"].astype(jnp.float32),
                                       W).astype(compute_dtype),
        "wbs2": _banded_weight_stacked(params["w2"].astype(jnp.float32),
                                       W).astype(compute_dtype),
        "g1": params["g1"].reshape(1, C).astype(jnp.float32),
        "b1": params["b1"].reshape(1, C).astype(jnp.float32),
        "g2": params["g2"].reshape(1, C).astype(jnp.float32),
        "b2": params["b2"].reshape(1, C).astype(jnp.float32),
        "fold2": fold2,
        "expand": expand,
    }


def basic_block_apply(x_lane, prep):
    """Fused BasicBlock on the lane-dense (N, H, W*C) layout (chainable)."""
    N, H, WC = x_lane.shape
    C = prep["g1"].shape[-1]
    vmem = pl.BlockSpec(memory_space=pltpu.MemorySpace.VMEM)

    w_bytes = (prep["wbs1"].size + prep["wbs2"].size) * prep["wbs1"].dtype.itemsize
    cost = pl.CostEstimate(
        flops=2 * 2 * (N * H) * (3 * WC) * WC,          # two banded conv matmuls
        transcendentals=2 * C,                           # two per-channel rsqrt
        bytes_accessed=4 * (2 * x_lane.size) + w_bytes
        + 4 * (prep["fold2"].size + prep["expand"].size))

    out = pl.pallas_call(
        _basic_block_kernel,
        out_shape=jax.ShapeDtypeStruct((N * H, WC), jnp.float32),
        in_specs=[vmem] * 9,
        out_specs=vmem,
        compiler_params=pltpu.CompilerParams(vmem_limit_bytes=32 * 1024 * 1024),
        cost_estimate=cost,
    )(x_lane.astype(jnp.float32), prep["wbs1"], prep["wbs2"], prep["g1"],
      prep["b1"], prep["g2"], prep["b2"], prep["fold2"], prep["expand"])
    return out.reshape(N, H, WC)


# --- NCHW boundary conversion (only at the CNN-stack boundary) --------------
def nchw_to_lane(x_nchw):
    N, C, H, W = x_nchw.shape
    return jnp.transpose(x_nchw, (0, 2, 3, 1)).reshape(N, H, W * C)


def lane_to_nchw(x_lane, C):
    N, H, WC = x_lane.shape
    return jnp.transpose(x_lane.reshape(N, H, WC // C, C), (0, 3, 1, 2))


def basic_block_forward_nchw(x_nchw, prep):
    return lane_to_nchw(basic_block_apply(nchw_to_lane(x_nchw), prep),
                        x_nchw.shape[1])


# ---------------------------------------------------------------------------
# Pure-JAX reference (for correctness check)
# ---------------------------------------------------------------------------
def _ref_conv_bn(x_nhwc, w_hwio, gamma, beta):
    y = lax.conv_general_dilated(
        x_nhwc, w_hwio, window_strides=(1, 1), padding=((1, 1), (1, 1)),
        dimension_numbers=("NHWC", "HWIO", "NHWC"))
    mean = jnp.mean(y, axis=(0, 1, 2), keepdims=True)
    var = jnp.mean(jnp.square(y - mean), axis=(0, 1, 2), keepdims=True)
    return (y - mean) * lax.rsqrt(var + EPS) * gamma.reshape(1, 1, 1, -1) \
        + beta.reshape(1, 1, 1, -1)


def basic_block_reference(x_nchw, params):
    x = jnp.transpose(x_nchw, (0, 2, 3, 1)).astype(jnp.float32)
    out1 = jnp.maximum(_ref_conv_bn(x, params["w1"], params["g1"], params["b1"]), 0.0)
    out2 = _ref_conv_bn(out1, params["w2"], params["g2"], params["b2"]) + x
    return jnp.transpose(jnp.maximum(out2, 0.0), (0, 3, 1, 2))


# ---------------------------------------------------------------------------
# Main
# ---------------------------------------------------------------------------
if __name__ == "__main__":
    key = jax.random.PRNGKey(0)
    N, C, H, W = 2, 8, 16, 16          # W*C = 128 -> exactly lane-dense

    k_x, k_w1, k_w2, k_g1, k_b1, k_g2, k_b2 = jax.random.split(key, 7)
    x = jax.random.normal(k_x, (N, C, H, W), dtype=jnp.float32)

    # PyTorch conv weight layout (Cout, Cin, 3, 3) -> HWIO (3, 3, Cin, Cout)
    w1_torch = 0.1 * jax.random.normal(k_w1, (C, C, 3, 3), dtype=jnp.float32)
    w2_torch = 0.1 * jax.random.normal(k_w2, (C, C, 3, 3), dtype=jnp.float32)
    params = {
        "w1": jnp.transpose(w1_torch, (2, 3, 1, 0)),
        "w2": jnp.transpose(w2_torch, (2, 3, 1, 0)),
        "g1": 1.0 + 0.1 * jax.random.normal(k_g1, (C,), dtype=jnp.float32),
        "b1": 0.1 * jax.random.normal(k_b1, (C,), dtype=jnp.float32),
        "g2": 1.0 + 0.1 * jax.random.normal(k_g2, (C,), dtype=jnp.float32),
        "b2": 0.1 * jax.random.normal(k_b2, (C,), dtype=jnp.float32),
    }

    ref = jax.block_until_ready(basic_block_reference(x, params))
    fwd = jax.jit(basic_block_forward_nchw)

    # f32 MXU operands: bit-for-bit module numerics, tight check.
    prep_f32 = prepare_basic_block(params, W, compute_dtype=jnp.float32)
    out_f32 = jax.block_until_ready(fwd(x, prep_f32))
    assert out_f32.shape == (N, C, H, W)
    err_f32 = float(jnp.max(jnp.abs(out_f32 - ref)))
    assert err_f32 < 1e-3, f"f32 path max abs err {err_f32}"

    # bf16 MXU operands (f32 accumulate + f32 BN): perf path, loose smoke check.
    prep_bf16 = prepare_basic_block(params, W, compute_dtype=jnp.bfloat16)
    out_bf16 = jax.block_until_ready(fwd(x, prep_bf16))
    err_bf16 = float(jnp.max(jnp.abs(out_bf16 - ref)))
    assert err_bf16 < 1e-1, f"bf16 path max abs err {err_bf16}"

    print("KERNEL_OK")
</pallas_src>

<mosaic_0001>
module attributes {stable_mosaic.version = 11 : i64} {
  func.func @_basic_block_kernel(%arg0: memref<2x16x128xf32, #tpu.memory_space<vmem>>, %arg1: memref<384x128xf32, #tpu.memory_space<vmem>>, %arg2: memref<384x128xf32, #tpu.memory_space<vmem>>, %arg3: memref<1x8xf32, #tpu.memory_space<vmem>>, %arg4: memref<1x8xf32, #tpu.memory_space<vmem>>, %arg5: memref<1x8xf32, #tpu.memory_space<vmem>>, %arg6: memref<1x8xf32, #tpu.memory_space<vmem>>, %arg7: memref<256x16xf32, #tpu.memory_space<vmem>>, %arg8: memref<8x128xf32, #tpu.memory_space<vmem>>, %arg9: memref<32x128xf32, #tpu.memory_space<vmem>>) attributes {dimension_semantics = [], scalar_prefetch = 0 : i64, scratch_operands = 0 : i64, tpu.core_type = #tpu.core_type<tc>} {
    %c0 = arith.constant 0 : index
    %c0_0 = arith.constant 0 : index
    %c0_1 = arith.constant 0 : index
    %0 = vector.load %arg0[%c0, %c0_0, %c0_1] : memref<2x16x128xf32, #tpu.memory_space<vmem>>, vector<2x16x128xf32>
    %cst = arith.constant 0.000000e+00 : f32
    %1 = vector.broadcast %cst : f32 to vector<2x1x128xf32>
    %cst_2 = arith.constant 1.000000e+00 : f32
    %2 = vector.broadcast %cst_2 : f32 to vector<1x32xf32>
    %c0_3 = arith.constant 0 : index
    %c0_4 = arith.constant 0 : index
    %3 = vector.load %arg7[%c0_3, %c0_4] : memref<256x16xf32, #tpu.memory_space<vmem>>, vector<256x16xf32>
    %c0_5 = arith.constant 0 : index
    %c0_6 = arith.constant 0 : index
    %4 = vector.load %arg8[%c0_5, %c0_6] : memref<8x128xf32, #tpu.memory_space<vmem>>, vector<8x128xf32>
    %5 = vector.extract_strided_slice %0 {offsets = [0, 0, 0], sizes = [2, 15, 128], strides = [1, 1, 1]} : vector<2x16x128xf32> to vector<2x15x128xf32>
    %6 = tpu.concatenate %1, %5 in 1 : vector<2x1x128xf32>, vector<2x15x128xf32> -> vector<2x16x128xf32>
    %7 = vector.extract_strided_slice %0 {offsets = [0, 1, 0], sizes = [2, 15, 128], strides = [1, 1, 1]} : vector<2x16x128xf32> to vector<2x15x128xf32>
    %8 = tpu.concatenate %7, %1 in 1 : vector<2x15x128xf32>, vector<2x1x128xf32> -> vector<2x16x128xf32>
    %9 = tpu.concatenate %6, %0, %8 in 2 : vector<2x16x128xf32>, vector<2x16x128xf32>, vector<2x16x128xf32> -> vector<2x16x384xf32>
    %10 = vector.shape_cast %9 : vector<2x16x384xf32> to vector<32x384xf32>
    %c0_7 = arith.constant 0 : index
    %c0_8 = arith.constant 0 : index
    %11 = vector.load %arg1[%c0_7, %c0_8] : memref<384x128xf32, #tpu.memory_space<vmem>>, vector<384x128xf32>
    %cst_9 = arith.constant dense<0.000000e+00> : vector<32x128xf32>
    %12 = tpu.matmul %10, %11, %cst_9 {dimension_numbers = #tpu.dot_dimension_numbers<[1], [0], [0], [1], [0, 0, 1, 1], [], []>} : vector<32x384xf32>, vector<384x128xf32>, vector<32x128xf32> -> vector<32x128xf32>
    %13 = arith.mulf %12, %12 : vector<32x128xf32>
    %14 = tpu.concatenate %12, %13 in 1 : vector<32x128xf32>, vector<32x128xf32> -> vector<32x256xf32>
    %cst_10 = arith.constant dense<0.000000e+00> : vector<1x256xf32>
    %15 = tpu.matmul %2, %14, %cst_10 {dimension_numbers = #tpu.dot_dimension_numbers<[1], [0], [0], [1], [0, 0, 1, 1], [], []>} : vector<1x32xf32>, vector<32x256xf32>, vector<1x256xf32> -> vector<1x256xf32>
    %cst_11 = arith.constant dense<0.000000e+00> : vector<1x16xf32>
    %16 = tpu.matmul %15, %3, %cst_11 {dimension_numbers = #tpu.dot_dimension_numbers<[1], [0], [0], [1], [0, 0, 1, 1], [], []>} : vector<1x256xf32>, vector<256x16xf32>, vector<1x16xf32> -> vector<1x16xf32>
    %17 = vector.extract_strided_slice %16 {offsets = [0, 0], sizes = [1, 8], strides = [1, 1]} : vector<1x16xf32> to vector<1x8xf32>
    %cst_12 = arith.constant 0.001953125 : f32
    %18 = vector.broadcast %cst_12 : f32 to vector<1x8xf32>
    %19 = arith.mulf %17, %18 : vector<1x8xf32>
    %20 = vector.extract_strided_slice %16 {offsets = [0, 8], sizes = [1, 8], strides = [1, 1]} : vector<1x16xf32> to vector<1x8xf32>
    %cst_13 = arith.constant 0.001953125 : f32
    %21 = vector.broadcast %cst_13 : f32 to vector<1x8xf32>
    %22 = arith.mulf %20, %21 : vector<1x8xf32>
    %23 = arith.mulf %19, %19 : vector<1x8xf32>
    %24 = arith.subf %22, %23 : vector<1x8xf32>
    %cst_14 = arith.constant 0.000000e+00 : f32
    %25 = vector.broadcast %cst_14 : f32 to vector<1x8xf32>
    %26 = arith.maximumf %24, %25 : vector<1x8xf32>
    %c0_15 = arith.constant 0 : index
    %c0_16 = arith.constant 0 : index
    %27 = vector.load %arg3[%c0_15, %c0_16] : memref<1x8xf32, #tpu.memory_space<vmem>>, vector<1x8xf32>
    %cst_17 = arith.constant 9.99999974E-6 : f32
    %28 = vector.broadcast %cst_17 : f32 to vector<1x8xf32>
    %29 = arith.addf %26, %28 : vector<1x8xf32>
    %30 = math.rsqrt %29 : vector<1x8xf32>
    %31 = arith.mulf %27, %30 : vector<1x8xf32>
    %c0_18 = arith.constant 0 : index
    %c0_19 = arith.constant 0 : index
    %32 = vector.load %arg4[%c0_18, %c0_19] : memref<1x8xf32, #tpu.memory_space<vmem>>, vector<1x8xf32>
    %33 = arith.mulf %19, %31 : vector<1x8xf32>
    %34 = arith.subf %32, %33 : vector<1x8xf32>
    %35 = tpu.concatenate %31, %34 in 0 : vector<1x8xf32>, vector<1x8xf32> -> vector<2x8xf32>
    %cst_20 = arith.constant dense<0.000000e+00> : vector<2x128xf32>
    %36 = tpu.matmul %35, %4, %cst_20 {dimension_numbers = #tpu.dot_dimension_numbers<[1], [0], [0], [1], [0, 0, 1, 1], [], []>} : vector<2x8xf32>, vector<8x128xf32>, vector<2x128xf32> -> vector<2x128xf32>
    %37 = vector.extract_strided_slice %36 {offsets = [0, 0], sizes = [1, 128], strides = [1, 1]} : vector<2x128xf32> to vector<1x128xf32>
    %38 = vector.broadcast %37 : vector<1x128xf32> to vector<32x128xf32>
    %39 = arith.mulf %12, %38 : vector<32x128xf32>
    %40 = vector.extract_strided_slice %36 {offsets = [1, 0], sizes = [1, 128], strides = [1, 1]} : vector<2x128xf32> to vector<1x128xf32>
    %41 = vector.broadcast %40 : vector<1x128xf32> to vector<32x128xf32>
    %42 = arith.addf %39, %41 : vector<32x128xf32>
    %cst_21 = arith.constant 0.000000e+00 : f32
    %43 = vector.broadcast %cst_21 : f32 to vector<32x128xf32>
    %44 = arith.maximumf %42, %43 : vector<32x128xf32>
    %45 = vector.shape_cast %44 : vector<32x128xf32> to vector<2x16x128xf32>
    %46 = vector.extract_strided_slice %45 {offsets = [0, 0, 0], sizes = [2, 15, 128], strides = [1, 1, 1]} : vector<2x16x128xf32> to vector<2x15x128xf32>
    %47 = tpu.concatenate %1, %46 in 1 : vector<2x1x128xf32>, vector<2x15x128xf32> -> vector<2x16x128xf32>
    %48 = vector.extract_strided_slice %45 {offsets = [0, 1, 0], sizes = [2, 15, 128], strides = [1, 1, 1]} : vector<2x16x128xf32> to vector<2x15x128xf32>
    %49 = tpu.concatenate %48, %1 in 1 : vector<2x15x128xf32>, vector<2x1x128xf32> -> vector<2x16x128xf32>
    %50 = tpu.concatenate %47, %45, %49 in 2 : vector<2x16x128xf32>, vector<2x16x128xf32>, vector<2x16x128xf32> -> vector<2x16x384xf32>
    %51 = vector.shape_cast %50 : vector<2x16x384xf32> to vector<32x384xf32>
    %c0_22 = arith.constant 0 : index
    %c0_23 = arith.constant 0 : index
    %52 = vector.load %arg2[%c0_22, %c0_23] : memref<384x128xf32, #tpu.memory_space<vmem>>, vector<384x128xf32>
    %cst_24 = arith.constant dense<0.000000e+00> : vector<32x128xf32>
    %53 = tpu.matmul %51, %52, %cst_24 {dimension_numbers = #tpu.dot_dimension_numbers<[1], [0], [0], [1], [0, 0, 1, 1], [], []>} : vector<32x384xf32>, vector<384x128xf32>, vector<32x128xf32> -> vector<32x128xf32>
    %54 = arith.mulf %53, %53 : vector<32x128xf32>
    %55 = tpu.concatenate %53, %54 in 1 : vector<32x128xf32>, vector<32x128xf32> -> vector<32x256xf32>
    %cst_25 = arith.constant dense<0.000000e+00> : vector<1x256xf32>
    %56 = tpu.matmul %2, %55, %cst_25 {dimension_numbers = #tpu.dot_dimension_numbers<[1], [0], [0], [1], [0, 0, 1, 1], [], []>} : vector<1x32xf32>, vector<32x256xf32>, vector<1x256xf32> -> vector<1x256xf32>
    %cst_26 = arith.constant dense<0.000000e+00> : vector<1x16xf32>
    %57 = tpu.matmul %56, %3, %cst_26 {dimension_numbers = #tpu.dot_dimension_numbers<[1], [0], [0], [1], [0, 0, 1, 1], [], []>} : vector<1x256xf32>, vector<256x16xf32>, vector<1x16xf32> -> vector<1x16xf32>
    %58 = vector.extract_strided_slice %57 {offsets = [0, 0], sizes = [1, 8], strides = [1, 1]} : vector<1x16xf32> to vector<1x8xf32>
    %cst_27 = arith.constant 0.001953125 : f32
    %59 = vector.broadcast %cst_27 : f32 to vector<1x8xf32>
    %60 = arith.mulf %58, %59 : vector<1x8xf32>
    %61 = vector.extract_strided_slice %57 {offsets = [0, 8], sizes = [1, 8], strides = [1, 1]} : vector<1x16xf32> to vector<1x8xf32>
    %cst_28 = arith.constant 0.001953125 : f32
    %62 = vector.broadcast %cst_28 : f32 to vector<1x8xf32>
    %63 = arith.mulf %61, %62 : vector<1x8xf32>
    %64 = arith.mulf %60, %60 : vector<1x8xf32>
    %65 = arith.subf %63, %64 : vector<1x8xf32>
    %cst_29 = arith.constant 0.000000e+00 : f32
    %66 = vector.broadcast %cst_29 : f32 to vector<1x8xf32>
    %67 = arith.maximumf %65, %66 : vector<1x8xf32>
    %c0_30 = arith.constant 0 : index
    %c0_31 = arith.constant 0 : index
    %68 = vector.load %arg5[%c0_30, %c0_31] : memref<1x8xf32, #tpu.memory_space<vmem>>, vector<1x8xf32>
    %cst_32 = arith.constant 9.99999974E-6 : f32
    %69 = vector.broadcast %cst_32 : f32 to vector<1x8xf32>
    %70 = arith.addf %67, %69 : vector<1x8xf32>
    %71 = math.rsqrt %70 : vector<1x8xf32>
    %72 = arith.mulf %68, %71 : vector<1x8xf32>
    %c0_33 = arith.constant 0 : index
    %c0_34 = arith.constant 0 : index
    %73 = vector.load %arg6[%c0_33, %c0_34] : memref<1x8xf32, #tpu.memory_space<vmem>>, vector<1x8xf32>
    %74 = arith.mulf %60, %72 : vector<1x8xf32>
    %75 = arith.subf %73, %74 : vector<1x8xf32>
    %76 = tpu.concatenate %72, %75 in 0 : vector<1x8xf32>, vector<1x8xf32> -> vector<2x8xf32>
    %cst_35 = arith.constant dense<0.000000e+00> : vector<2x128xf32>
    %77 = tpu.matmul %76, %4, %cst_35 {dimension_numbers = #tpu.dot_dimension_numbers<[1], [0], [0], [1], [0, 0, 1, 1], [], []>} : vector<2x8xf32>, vector<8x128xf32>, vector<2x128xf32> -> vector<2x128xf32>
    %78 = vector.extract_strided_slice %77 {offsets = [0, 0], sizes = [1, 128], strides = [1, 1]} : vector<2x128xf32> to vector<1x128xf32>
    %79 = vector.broadcast %78 : vector<1x128xf32> to vector<32x128xf32>
    %80 = arith.mulf %53, %79 : vector<32x128xf32>
    %81 = vector.extract_strided_slice %77 {offsets = [1, 0], sizes = [1, 128], strides = [1, 1]} : vector<2x128xf32> to vector<1x128xf32>
    %82 = vector.broadcast %81 : vector<1x128xf32> to vector<32x128xf32>
    %83 = arith.addf %80, %82 : vector<32x128xf32>
    %84 = vector.shape_cast %0 : vector<2x16x128xf32> to vector<32x128xf32>
    %85 = arith.addf %83, %84 : vector<32x128xf32>
    %cst_36 = arith.constant 0.000000e+00 : f32
    %86 = vector.broadcast %cst_36 : f32 to vector<32x128xf32>
    %87 = arith.maximumf %85, %86 : vector<32x128xf32>
    %c0_37 = arith.constant 0 : index
    %c0_38 = arith.constant 0 : index
    %88 = vector.load %arg9[%c0_37, %c0_38] : memref<32x128xf32, #tpu.memory_space<vmem>>, vector<32x128xf32>
    tpu.vector_store %arg9[%c0_37, %c0_38], %87 {strides = array<i32>} : memref<32x128xf32, #tpu.memory_space<vmem>>, vector<32x128xf32>,
    return
  }
}

</mosaic_0001>

<llo_original>
// kernel: basic_block_forward_nchw.1
$region0: #{basic_block_forward_nchw.1}
  #allocation0 [shape = 'u32[]', space=smem, size = 0x4, offset = 0x4, fixed_abs, tag = 'smem constant byte address 0x4 - core index']
  #allocation1 [shape = 'u32[72,128]{1,0:T(1,128)}', space=vmem, size = 0x9000, scoped, tag = 'internal scratch']
  %s0 = inlined_call_operand.vmem [shape: f32[2,16,128], index: 0, kind: input, shape index: {}]
  %s1 = inlined_call_operand.vmem [shape: f32[384,128], index: 1, kind: input, shape index: {}]
  %s2 = inlined_call_operand.vmem [shape: f32[384,128], index: 2, kind: input, shape index: {}]
  %s3 = inlined_call_operand.vmem [shape: f32[1,8], index: 3, kind: input, shape index: {}]
  %s4 = inlined_call_operand.vmem [shape: f32[1,8], index: 4, kind: input, shape index: {}]
  %s5 = inlined_call_operand.vmem [shape: f32[1,8], index: 5, kind: input, shape index: {}]
  %s6 = inlined_call_operand.vmem [shape: f32[1,8], index: 6, kind: input, shape index: {}]
  %s7 = inlined_call_operand.vmem [shape: f32[256,16], index: 7, kind: input, shape index: {}]
  %s8 = inlined_call_operand.vmem [shape: f32[8,128], index: 8, kind: input, shape index: {}]
  %s9 = inlined_call_operand.vmem [shape: f32[32,128], index: 9, kind: output, shape index: {}]
  %s10 = sld [smem:[#allocation0]]
  $region46: #{basic_block_forward_nchw.1} parent=0
    _
  %s12 = ssub.s32 1, %s10
  %s13 = scalar_select 0, %s12, %s10
  // Predicated region
  $region2: #{basic_block_forward_nchw.1} parent=0 // pred_check
    _
  $region3: #{basic_block_forward_nchw.1} parent=0 // pred_check_branch
    %15 = sbr.rel (0) target = $region5
  $region4: #{basic_block_forward_nchw.1} parent=0 // pred_region
    _
  $region5: #{basic_block_forward_nchw.1} parent=0 // pred_fallthru
    _
  // Predicated region
  $region6: #{basic_block_forward_nchw.1} parent=0 // pred_check
    _
  $region7: #{basic_block_forward_nchw.1} parent=0 // pred_check_branch
    %17 = sbr.rel (0) target = $region9
  $region8: #{basic_block_forward_nchw.1} parent=0 // pred_region
    _
  $region9: #{basic_block_forward_nchw.1} parent=0 // pred_fallthru
    _
  // Predicated region
  $region10: #{basic_block_forward_nchw.1} parent=0 // pred_check
    _
  $region11: #{basic_block_forward_nchw.1} parent=0 // pred_check_branch
    %19 = sbr.rel (0) target = $region13
  $region12: #{basic_block_forward_nchw.1} parent=0 // pred_region
    _
  $region13: #{basic_block_forward_nchw.1} parent=0 // pred_fallthru
    _
  // Predicated region
  $region14: #{basic_block_forward_nchw.1} parent=0 // pred_check
    _
  $region15: #{basic_block_forward_nchw.1} parent=0 // pred_check_branch
    %21 = sbr.rel (0) target = $region17
  $region16: #{basic_block_forward_nchw.1} parent=0 // pred_region
    _
  $region17: #{basic_block_forward_nchw.1} parent=0 // pred_fallthru
    _
  // Predicated region
  $region18: #{basic_block_forward_nchw.1} parent=0 // pred_check
    _
  $region19: #{basic_block_forward_nchw.1} parent=0 // pred_check_branch
    %23 = sbr.rel (0) target = $region21
  $region20: #{basic_block_forward_nchw.1} parent=0 // pred_region
    _
  $region21: #{basic_block_forward_nchw.1} parent=0 // pred_fallthru
    _
  // Predicated region
  $region22: #{basic_block_forward_nchw.1} parent=0 // pred_check
    _
  $region23: #{basic_block_forward_nchw.1} parent=0 // pred_check_branch
    %25 = sbr.rel (0) target = $region25
  $region24: #{basic_block_forward_nchw.1} parent=0 // pred_region
    _
  $region25: #{basic_block_forward_nchw.1} parent=0 // pred_fallthru
    _
  // Predicated region
  $region26: #{basic_block_forward_nchw.1} parent=0 // pred_check
    _
  $region27: #{basic_block_forward_nchw.1} parent=0 // pred_check_branch
    %27 = sbr.rel (0) target = $region29
  $region28: #{basic_block_forward_nchw.1} parent=0 // pred_region
    _
  $region29: #{basic_block_forward_nchw.1} parent=0 // pred_fallthru
    _
  // Predicated region
  $region30: #{basic_block_forward_nchw.1} parent=0 // pred_check
    _
  $region31: #{basic_block_forward_nchw.1} parent=0 // pred_check_branch
    %29 = sbr.rel (0) target = $region33
  $region32: #{basic_block_forward_nchw.1} parent=0 // pred_region
    _
  $region33: #{basic_block_forward_nchw.1} parent=0 // pred_fallthru
    _
  // Predicated region
  $region34: #{basic_block_forward_nchw.1} parent=0 // pred_check
    _
  $region35: #{basic_block_forward_nchw.1} parent=0 // pred_check_branch
    %31 = sbr.rel (0) target = $region37
  $region36: #{basic_block_forward_nchw.1} parent=0 // pred_region
    _
  $region37: #{basic_block_forward_nchw.1} parent=0 // pred_fallthru
    _
  %v32 = vld [vmem:[%s0] sm:$0xff]
  %v33 = vld [vmem:[%s0 + $0x8] sm:$0xff]
  %v34 = vld [vmem:[%s0 + $0x10] sm:$0xff]
  %v35 = vld [vmem:[%s0 + $0x18] sm:$0xff]
  %v36 = vld [vmem:[%s7] sm:$0xff]
  %v37 = vld [vmem:[%s7 + $0x8] sm:$0xff]
  %v38 = vld [vmem:[%s7 + $0x10] sm:$0xff]
  %v39 = vld [vmem:[%s7 + $0x18] sm:$0xff]
  %v40 = vld [vmem:[%s7 + $0x20] sm:$0xff]
  %v41 = vld [vmem:[%s7 + $0x28] sm:$0xff]
  %v42 = vld [vmem:[%s7 + $0x30] sm:$0xff]
  %v43 = vld [vmem:[%s7 + $0x38] sm:$0xff]
  %v44 = vld [vmem:[%s7 + $0x40] sm:$0xff]
  %v45 = vld [vmem:[%s7 + $0x48] sm:$0xff]
  %v46 = vld [vmem:[%s7 + $0x50] sm:$0xff]
  %v47 = vld [vmem:[%s7 + $0x58] sm:$0xff]
  %v48 = vld [vmem:[%s7 + $0x60] sm:$0xff]
  %v49 = vld [vmem:[%s7 + $0x68] sm:$0xff]
  %v50 = vld [vmem:[%s7 + $0x70] sm:$0xff]
  %v51 = vld [vmem:[%s7 + $0x78] sm:$0xff]
  %v52 = vld [vmem:[%s7 + $0x80] sm:$0xff]
  %v53 = vld [vmem:[%s7 + $0x88] sm:$0xff]
  %v54 = vld [vmem:[%s7 + $0x90] sm:$0xff]
  %v55 = vld [vmem:[%s7 + $0x98] sm:$0xff]
  %v56 = vld [vmem:[%s7 + $0xa0] sm:$0xff]
  %v57 = vld [vmem:[%s7 + $0xa8] sm:$0xff]
  %v58 = vld [vmem:[%s7 + $0xb0] sm:$0xff]
  %v59 = vld [vmem:[%s7 + $0xb8] sm:$0xff]
  %v60 = vld [vmem:[%s7 + $0xc0] sm:$0xff]
  %v61 = vld [vmem:[%s7 + $0xc8] sm:$0xff]
  %v62 = vld [vmem:[%s7 + $0xd0] sm:$0xff]
  %v63 = vld [vmem:[%s7 + $0xd8] sm:$0xff]
  %v64 = vld [vmem:[%s7 + $0xe0] sm:$0xff]
  %v65 = vld [vmem:[%s7 + $0xe8] sm:$0xff]
  %v66 = vld [vmem:[%s7 + $0xf0] sm:$0xff]
  %v67 = vld [vmem:[%s7 + $0xf8] sm:$0xff]
  %v68 = vld [vmem:[%s8] sm:$0xff]
  %vm73 = vcmask 1040384
  %v74 = vrot.slane %v32, 7
  %v75 = vrot.slane %v33, 7
  %v76 = vsel %vm73, %v74, %v75
  %v77 = vrot.slane %v34, 7
  %v78 = vrot.slane %v35, 7
  %v79 = vsel %vm73, %v77, %v78
  %v84 = vsel %vm73, 0.0, %v74
  %v85 = vsel %vm73, 0.0, %v77
  %vm86 = vcmask 1046528
  %v87 = vrot.slane %v32, 1
  %v88 = vrot.slane %v33, 1
  %v89 = vsel %vm86, %v87, %v88
  %v90 = vrot.slane %v34, 1
  %v91 = vrot.slane %v35, 1
  %v92 = vsel %vm86, %v90, %v91
  %v97 = vsel %vm86, %v88, 0.0
  %v98 = vsel %vm86, %v91, 0.0
  %v99 = vld [vmem:[%s1] sm:$0xff]
  %v100 = vld [vmem:[%s1 + $0x8] sm:$0xff]
  %v101 = vld [vmem:[%s1 + $0x10] sm:$0xff]
  %v102 = vld [vmem:[%s1 + $0x18] sm:$0xff]
  %v103 = vld [vmem:[%s1 + $0x20] sm:$0xff]
  %v104 = vld [vmem:[%s1 + $0x28] sm:$0xff]
  %v105 = vld [vmem:[%s1 + $0x30] sm:$0xff]
  %v106 = vld [vmem:[%s1 + $0x38] sm:$0xff]
  %v107 = vld [vmem:[%s1 + $0x40] sm:$0xff]
  %v108 = vld [vmem:[%s1 + $0x48] sm:$0xff]
  %v109 = vld [vmem:[%s1 + $0x50] sm:$0xff]
  %v110 = vld [vmem:[%s1 + $0x58] sm:$0xff]
  %v111 = vld [vmem:[%s1 + $0x60] sm:$0xff]
  %v112 = vld [vmem:[%s1 + $0x68] sm:$0xff]
  %v113 = vld [vmem:[%s1 + $0x70] sm:$0xff]
  %v114 = vld [vmem:[%s1 + $0x78] sm:$0xff]
  %v115 = vld [vmem:[%s1 + $0x80] sm:$0xff]
  %v116 = vld [vmem:[%s1 + $0x88] sm:$0xff]
  %v117 = vld [vmem:[%s1 + $0x90] sm:$0xff]
  %v118 = vld [vmem:[%s1 + $0x98] sm:$0xff]
  %v119 = vld [vmem:[%s1 + $0xa0] sm:$0xff]
  %v120 = vld [vmem:[%s1 + $0xa8] sm:$0xff]
  %v121 = vld [vmem:[%s1 + $0xb0] sm:$0xff]
  %v122 = vld [vmem:[%s1 + $0xb8] sm:$0xff]
  %v123 = vld [vmem:[%s1 + $0xc0] sm:$0xff]
  %v124 = vld [vmem:[%s1 + $0xc8] sm:$0xff]
  %v125 = vld [vmem:[%s1 + $0xd0] sm:$0xff]
  %v126 = vld [vmem:[%s1 + $0xd8] sm:$0xff]
  %v127 = vld [vmem:[%s1 + $0xe0] sm:$0xff]
  %v128 = vld [vmem:[%s1 + $0xe8] sm:$0xff]
  %v129 = vld [vmem:[%s1 + $0xf0] sm:$0xff]
  %v130 = vld [vmem:[%s1 + $0xf8] sm:$0xff]
  %v131 = vld [vmem:[%s1 + $0x100] sm:$0xff]
  %v132 = vld [vmem:[%s1 + $0x108] sm:$0xff]
  %v133 = vld [vmem:[%s1 + $0x110] sm:$0xff]
  %v134 = vld [vmem:[%s1 + $0x118] sm:$0xff]
  %v135 = vld [vmem:[%s1 + $0x120] sm:$0xff]
  %v136 = vld [vmem:[%s1 + $0x128] sm:$0xff]
  %v137 = vld [vmem:[%s1 + $0x130] sm:$0xff]
  %v138 = vld [vmem:[%s1 + $0x138] sm:$0xff]
  %v139 = vld [vmem:[%s1 + $0x140] sm:$0xff]
  %v140 = vld [vmem:[%s1 + $0x148] sm:$0xff]
  %v141 = vld [vmem:[%s1 + $0x150] sm:$0xff]
  %v142 = vld [vmem:[%s1 + $0x158] sm:$0xff]
  %v143 = vld [vmem:[%s1 + $0x160] sm:$0xff]
  %v144 = vld [vmem:[%s1 + $0x168] sm:$0xff]
  %v145 = vld [vmem:[%s1 + $0x170] sm:$0xff]
  %v146 = vld [vmem:[%s1 + $0x178] sm:$0xff]
  %147 = vmatpush.msra.mxu0 %v114
  %148 = vmatpush.msra.mxu0 %v113
  %149 = vmatpush.msra.mxu0 %v112
  %150 = vmatpush.msra.mxu0 %v111
  %151 = vmatpush.msra.mxu0 %v110
  %152 = vmatpush.msra.mxu0 %v109
  %153 = vmatpush.msra.mxu0 %v108
  %154 = vmatpush.msra.mxu0 %v107
  %155 = vmatpush.msra.mxu0 %v106
  %156 = vmatpush.msra.mxu0 %v105
  %157 = vmatpush.msra.mxu0 %v104
  %158 = vmatpush.msra.mxu0 %v103
  %159 = vmatpush.msra.mxu0 %v102
  %160 = vmatpush.msra.mxu0 %v101
  %161 = vmatpush.msra.mxu0 %v100
  %162 = vmatpush.msra.mxu0 %v99
  %163 = vmatmul.f32.gmra.mxu0 %v84
  %v164 = vpop.f32.mrf.mxu0
  %v165 = vadd.f32 0.0, %v164
  %166 = vmatmul.f32.gmra.mxu0 %v76
  %v167 = vpop.f32.mrf.mxu0
  %v168 = vadd.f32 0.0, %v167
  %169 = vmatmul.f32.gmra.mxu0 %v85
  %v170 = vpop.f32.mrf.mxu0
  %v171 = vadd.f32 0.0, %v170
  %172 = vmatmul.f32.gmra.mxu0 %v79
  %v173 = vpop.f32.mrf.mxu0
  %v174 = vadd.f32 0.0, %v173
  %175 = vdwg.mxu0
  %176 = vmatpush.msra.mxu0 %v130
  %177 = vmatpush.msra.mxu0 %v129
  %178 = vmatpush.msra.mxu0 %v128
  %179 = vmatpush.msra.mxu0 %v127
  %180 = vmatpush.msra.mxu0 %v126
  %181 = vmatpush.msra.mxu0 %v125
  %182 = vmatpush.msra.mxu0 %v124
  %183 = vmatpush.msra.mxu0 %v123
  %184 = vmatpush.msra.mxu0 %v122
  %185 = vmatpush.msra.mxu0 %v121
  %186 = vmatpush.msra.mxu0 %v120
  %187 = vmatpush.msra.mxu0 %v119
  %188 = vmatpush.msra.mxu0 %v118
  %189 = vmatpush.msra.mxu0 %v117
  %190 = vmatpush.msra.mxu0 %v116
  %191 = vmatpush.msra.mxu0 %v115
  %192 = vmatmul.f32.gmra.mxu0 %v32
  %v193 = vpop.f32.mrf.mxu0
  %v194 = vadd.f32 %v165, %v193
  %195 = vmatmul.f32.gmra.mxu0 %v33
  %v196 = vpop.f32.mrf.mxu0
  %v197 = vadd.f32 %v168, %v196
  %198 = vmatmul.f32.gmra.mxu0 %v34
  %v199 = vpop.f32.mrf.mxu0
  %v200 = vadd.f32 %v171, %v199
  %201 = vmatmul.f32.gmra.mxu0 %v35
  %v202 = vpop.f32.mrf.mxu0
  %v203 = vadd.f32 %v174, %v202
  %204 = vdwg.mxu0
  %205 = vmatpush.msra.mxu0 %v146
  %206 = vmatpush.msra.mxu0 %v145
  %207 = vmatpush.msra.mxu0 %v144
  %208 = vmatpush.msra.mxu0 %v143
  %209 = vmatpush.msra.mxu0 %v142
  %210 = vmatpush.msra.mxu0 %v141
  %211 = vmatpush.msra.mxu0 %v140
  %212 = vmatpush.msra.mxu0 %v139
  %213 = vmatpush.msra.mxu0 %v138
  %214 = vmatpush.msra.mxu0 %v137
  %215 = vmatpush.msra.mxu0 %v136
  %216 = vmatpush.msra.mxu0 %v135
  %217 = vmatpush.msra.mxu0 %v134
  %218 = vmatpush.msra.mxu0 %v133
  %219 = vmatpush.msra.mxu0 %v132
  %220 = vmatpush.msra.mxu0 %v131
  %221 = vmatmul.f32.gmra.mxu0 %v89
  %v222 = vpop.f32.mrf.mxu0
  %v223 = vadd.f32 %v194, %v222
  %224 = vmatmul.f32.gmra.mxu0 %v97
  %v225 = vpop.f32.mrf.mxu0
  %v226 = vadd.f32 %v197, %v225
  %227 = vmatmul.f32.gmra.mxu0 %v92
  %v228 = vpop.f32.mrf.mxu0
  %v229 = vadd.f32 %v200, %v228
  %230 = vmatmul.f32.gmra.mxu0 %v98
  %v231 = vpop.f32.mrf.mxu0
  %v232 = vadd.f32 %v203, %v231
  %233 = vdwg.mxu0
  %v234 = vmul.f32 %v223, %v223
  %v235 = vmul.f32 %v226, %v226
  %v236 = vmul.f32 %v229, %v229
  %v237 = vmul.f32 %v232, %v232
  %vm238 = vcmask 261120
  %v240 = vsel %vm238, 1.0, 0
  %242 = vmatpush.msra.mxu0 0.0
  %243 = vmatpush.msra.mxu0 0.0
  %244 = vmatpush.msra.mxu0 0.0
  %245 = vmatpush.msra.mxu0 0.0
  %246 = vmatpush.msra.mxu0 0.0
  %247 = vmatpush.msra.mxu0 0.0
  %248 = vmatpush.msra.mxu0 0.0
  %249 = vmatpush.msra.mxu0 0.0
  %250 = vmatpush.msra.mxu0 0.0
  %251 = vmatpush.msra.mxu0 0.0
  %252 = vmatpush.msra.mxu0 0.0
  %253 = vmatpush.msra.mxu0 0.0
  %254 = vmatpush.msra.mxu0 %v232
  %255 = vmatpush.msra.mxu0 %v229
  %256 = vmatpush.msra.mxu0 %v226
  %257 = vmatpush.msra.mxu0 %v223
  %258 = vmatmul.f32.gmra.mxu0 %v240
  %v259 = vpop.f32.mrf.mxu0
  %v260 = vadd.f32 0.0, %v259
  %261 = vdwg.mxu0
  %262 = vmatpush.msra.mxu0 0.0
  %263 = vmatpush.msra.mxu0 0.0
  %264 = vmatpush.msra.mxu0 0.0
  %265 = vmatpush.msra.mxu0 0.0
  %266 = vmatpush.msra.mxu0 0.0
  %267 = vmatpush.msra.mxu0 0.0
  %268 = vmatpush.msra.mxu0 0.0
  %269 = vmatpush.msra.mxu0 0.0
  %270 = vmatpush.msra.mxu0 0.0
  %271 = vmatpush.msra.mxu0 0.0
  %272 = vmatpush.msra.mxu0 0.0
  %273 = vmatpush.msra.mxu0 0.0
  %274 = vmatpush.msra.mxu0 %v237
  %275 = vmatpush.msra.mxu0 %v236
  %276 = vmatpush.msra.mxu0 %v235
  %277 = vmatpush.msra.mxu0 %v234
  %278 = vmatmul.f32.gmra.mxu0 %v240
  %v279 = vpop.f32.mrf.mxu0
  %v280 = vadd.f32 0.0, %v279
  %281 = vdwg.mxu0
  %282 = vmatpush.msra.mxu0 %v51
  %283 = vmatpush.msra.mxu0 %v50
  %284 = vmatpush.msra.mxu0 %v49
  %285 = vmatpush.msra.mxu0 %v48
  %286 = vmatpush.msra.mxu0 %v47
  %287 = vmatpush.msra.mxu0 %v46
  %288 = vmatpush.msra.mxu0 %v45
  %289 = vmatpush.msra.mxu0 %v44
  %290 = vmatpush.msra.mxu0 %v43
  %291 = vmatpush.msra.mxu0 %v42
  %292 = vmatpush.msra.mxu0 %v41
  %293 = vmatpush.msra.mxu0 %v40
  %294 = vmatpush.msra.mxu0 %v39
  %295 = vmatpush.msra.mxu0 %v38
  %296 = vmatpush.msra.mxu0 %v37
  %297 = vmatpush.msra.mxu0 %v36
  %298 = vmatmul.f32.gmra.mxu0 %v260
  %v299 = vpop.f32.mrf.mxu0
  %v300 = vadd.f32 0.0, %v299
  %301 = vdwg.mxu0
  %302 = vmatpush.msra.mxu0 %v67
  %303 = vmatpush.msra.mxu0 %v66
  %304 = vmatpush.msra.mxu0 %v65
  %305 = vmatpush.msra.mxu0 %v64
  %306 = vmatpush.msra.mxu0 %v63
  %307 = vmatpush.msra.mxu0 %v62
  %308 = vmatpush.msra.mxu0 %v61
  %309 = vmatpush.msra.mxu0 %v60
  %310 = vmatpush.msra.mxu0 %v59
  %311 = vmatpush.msra.mxu0 %v58
  %312 = vmatpush.msra.mxu0 %v57
  %313 = vmatpush.msra.mxu0 %v56
  %314 = vmatpush.msra.mxu0 %v55
  %315 = vmatpush.msra.mxu0 %v54
  %316 = vmatpush.msra.mxu0 %v53
  %317 = vmatpush.msra.mxu0 %v52
  %318 = vmatmul.f32.gmra.mxu0 %v280
  %v319 = vpop.f32.mrf.mxu0
  %v320 = vadd.f32 %v300, %v319
  %321 = vdwg.mxu0
  %v322 = vmul.f32 %v320, 0.001953125
  %v323 = vmul.f32 %v322, %v322
  %325 = vrot.lane.b32.xlu0 %v323, 8
  %v326 = vpop.permute.xlu0 %325
  %v328 = vsub.f32 %v322, %v326
  %v329 = vmax.f32 %v328, 0.0
  %v330 = vld [vmem:[%s3] sm:$0x1]
  %v331 = vadd.f32 %v329, 1e-05
  %v332 = vrsqrt.pop %v331
  %v333 = vmul.f32 %v332, %v331
  %v334 = vmul.f32 %v333, %v332
  %v335 = vmul.f32 0.5, %v334
  %v336 = vsub.f32 1.5, %v335
  %v337 = vmul.f32 %v332, %v336
  %vm338 = vweird.f32 %v331
  %vm339 = vweird.f32 %v332
  %vm340 = vmor %vm338, %vm339
  %v341 = vsel %vm340, %v332, %v337
  %343 = vrot.lane.b32.xlu0 %v341, 120
  %v344 = vpop.permute.xlu0 %343
  %v346 = vmul.f32 %v330, %v344
  %v347 = vld [vmem:[%s4] sm:$0x1]
  %v348 = vmul.f32 %v322, %v346
  %v349 = vsub.f32 %v347, %v348
  %v351 = vperm.slane %v349, 0
  %v353 = vsel %vm73, %v346, %v351
  %vm354 = vcmask 64512
  %v356 = vsel %vm354, %v353, 0
  %358 = vmatpush.msra.mxu0 0.0
  %359 = vmatpush.msra.mxu0 0.0
  %360 = vmatpush.msra.mxu0 0.0
  %361 = vmatpush.msra.mxu0 0.0
  %362 = vmatpush.msra.mxu0 0.0
  %363 = vmatpush.msra.mxu0 0.0
  %364 = vmatpush.msra.mxu0 0.0
  %365 = vmatpush.msra.mxu0 0.0
  %366 = vmatpush.msra.mxu0 0.0
  %367 = vmatpush.msra.mxu0 0.0
  %368 = vmatpush.msra.mxu0 0.0
  %369 = vmatpush.msra.mxu0 0.0
  %370 = vmatpush.msra.mxu0 0.0
  %371 = vmatpush.msra.mxu0 0.0
  %372 = vmatpush.msra.mxu0 0.0
  %373 = vmatpush.msra.mxu0 %v68
  %374 = vmatmul.f32.gmra.mxu0 %v356
  %v375 = vpop.f32.mrf.mxu0
  %v376 = vadd.f32 0.0, %v375
  %377 = vdwg.mxu0
  %v378 = vperm.slane %v376, 0
  %v379 = vmul.f32 %v223, %v378
  %v380 = vmul.f32 %v226, %v378
  %v381 = vmul.f32 %v229, %v378
  %v382 = vmul.f32 %v232, %v378
  %v383 = vperm.slane %v376, 1
  %v384 = vadd.f32 %v379, %v383
  %v385 = vadd.f32 %v380, %v383
  %v386 = vadd.f32 %v381, %v383
  %v387 = vadd.f32 %v382, %v383
  %v388 = vmax.f32 %v384, 0.0
  %v389 = vmax.f32 %v385, 0.0
  %v390 = vmax.f32 %v386, 0.0
  %v391 = vmax.f32 %v387, 0.0
  %v396 = vrot.slane %v388, 7
  %v397 = vrot.slane %v389, 7
  %v398 = vsel %vm73, %v396, %v397
  %v399 = vrot.slane %v390, 7
  %v400 = vrot.slane %v391, 7
  %v401 = vsel %vm73, %v399, %v400
  %v406 = vsel %vm73, 0.0, %v396
  %v407 = vsel %vm73, 0.0, %v399
  %v408 = vrot.slane %v388, 1
  %v409 = vrot.slane %v389, 1
  %v410 = vsel %vm86, %v408, %v409
  %v411 = vrot.slane %v390, 1
  %v412 = vrot.slane %v391, 1
  %v413 = vsel %vm86, %v411, %v412
  %v418 = vsel %vm86, %v409, 0.0
  %v419 = vsel %vm86, %v412, 0.0
  %v420 = vld [vmem:[%s2] sm:$0xff]
  %v421 = vld [vmem:[%s2 + $0x8] sm:$0xff]
  %v422 = vld [vmem:[%s2 + $0x10] sm:$0xff]
  %v423 = vld [vmem:[%s2 + $0x18] sm:$0xff]
  %v424 = vld [vmem:[%s2 + $0x20] sm:$0xff]
  %v425 = vld [vmem:[%s2 + $0x28] sm:$0xff]
  %v426 = vld [vmem:[%s2 + $0x30] sm:$0xff]
  %v427 = vld [vmem:[%s2 + $0x38] sm:$0xff]
  %v428 = vld [vmem:[%s2 + $0x40] sm:$0xff]
  %v429 = vld [vmem:[%s2 + $0x48] sm:$0xff]
  %v430 = vld [vmem:[%s2 + $0x50] sm:$0xff]
  %v431 = vld [vmem:[%s2 + $0x58] sm:$0xff]
  %v432 = vld [vmem:[%s2 + $0x60] sm:$0xff]
  %v433 = vld [vmem:[%s2 + $0x68] sm:$0xff]
  %v434 = vld [vmem:[%s2 + $0x70] sm:$0xff]
  %v435 = vld [vmem:[%s2 + $0x78] sm:$0xff]
  %v436 = vld [vmem:[%s2 + $0x80] sm:$0xff]
  %v437 = vld [vmem:[%s2 + $0x88] sm:$0xff]
  %v438 = vld [vmem:[%s2 + $0x90] sm:$0xff]
  %v439 = vld [vmem:[%s2 + $0x98] sm:$0xff]
  %v440 = vld [vmem:[%s2 + $0xa0] sm:$0xff]
  %v441 = vld [vmem:[%s2 + $0xa8] sm:$0xff]
  %v442 = vld [vmem:[%s2 + $0xb0] sm:$0xff]
  %v443 = vld [vmem:[%s2 + $0xb8] sm:$0xff]
  %v444 = vld [vmem:[%s2 + $0xc0] sm:$0xff]
  %v445 = vld [vmem:[%s2 + $0xc8] sm:$0xff]
  %v446 = vld [vmem:[%s2 + $0xd0] sm:$0xff]
  %v447 = vld [vmem:[%s2 + $0xd8] sm:$0xff]
  %v448 = vld [vmem:[%s2 + $0xe0] sm:$0xff]
  %v449 = vld [vmem:[%s2 + $0xe8] sm:$0xff]
  %v450 = vld [vmem:[%s2 + $0xf0] sm:$0xff]
  %v451 = vld [vmem:[%s2 + $0xf8] sm:$0xff]
  %v452 = vld [vmem:[%s2 + $0x100] sm:$0xff]
  %v453 = vld [vmem:[%s2 + $0x108] sm:$0xff]
  %v454 = vld [vmem:[%s2 + $0x110] sm:$0xff]
  %v455 = vld [vmem:[%s2 + $0x118] sm:$0xff]
  %v456 = vld [vmem:[%s2 + $0x120] sm:$0xff]
  %v457 = vld [vmem:[%s2 + $0x128] sm:$0xff]
  %v458 = vld [vmem:[%s2 + $0x130] sm:$0xff]
  %v459 = vld [vmem:[%s2 + $0x138] sm:$0xff]
  %v460 = vld [vmem:[%s2 + $0x140] sm:$0xff]
  %v461 = vld [vmem:[%s2 + $0x148] sm:$0xff]
  %v462 = vld [vmem:[%s2 + $0x150] sm:$0xff]
  %v463 = vld [vmem:[%s2 + $0x158] sm:$0xff]
  %v464 = vld [vmem:[%s2 + $0x160] sm:$0xff]
  %v465 = vld [vmem:[%s2 + $0x168] sm:$0xff]
  %v466 = vld [vmem:[%s2 + $0x170] sm:$0xff]
  %v467 = vld [vmem:[%s2 + $0x178] sm:$0xff]
  %468 = vmatpush.msra.mxu0 %v435
  %469 = vmatpush.msra.mxu0 %v434
  %470 = vmatpush.msra.mxu0 %v433
  %471 = vmatpush.msra.mxu0 %v432
  %472 = vmatpush.msra.mxu0 %v431
  %473 = vmatpush.msra.mxu0 %v430
  %474 = vmatpush.msra.mxu0 %v429
  %475 = vmatpush.msra.mxu0 %v428
  %476 = vmatpush.msra.mxu0 %v427
  %477 = vmatpush.msra.mxu0 %v426
  %478 = vmatpush.msra.mxu0 %v425
  %479 = vmatpush.msra.mxu0 %v424
  %480 = vmatpush.msra.mxu0 %v423
  %481 = vmatpush.msra.mxu0 %v422
  %482 = vmatpush.msra.mxu0 %v421
  %483 = vmatpush.msra.mxu0 %v420
  %484 = vmatmul.f32.gmra.mxu0 %v406
  %v485 = vpop.f32.mrf.mxu0
  %v486 = vadd.f32 0.0, %v485
  %487 = vmatmul.f32.gmra.mxu0 %v398
  %v488 = vpop.f32.mrf.mxu0
  %v489 = vadd.f32 0.0, %v488
  %490 = vmatmul.f32.gmra.mxu0 %v407
  %v491 = vpop.f32.mrf.mxu0
  %v492 = vadd.f32 0.0, %v491
  %493 = vmatmul.f32.gmra.mxu0 %v401
  %v494 = vpop.f32.mrf.mxu0
  %v495 = vadd.f32 0.0, %v494
  %496 = vdwg.mxu0
  %497 = vmatpush.msra.mxu0 %v451
  %498 = vmatpush.msra.mxu0 %v450
  %499 = vmatpush.msra.mxu0 %v449
  %500 = vmatpush.msra.mxu0 %v448
  %501 = vmatpush.msra.mxu0 %v447
  %502 = vmatpush.msra.mxu0 %v446
  %503 = vmatpush.msra.mxu0 %v445
  %504 = vmatpush.msra.mxu0 %v444
  %505 = vmatpush.msra.mxu0 %v443
  %506 = vmatpush.msra.mxu0 %v442
  %507 = vmatpush.msra.mxu0 %v441
  %508 = vmatpush.msra.mxu0 %v440
  %509 = vmatpush.msra.mxu0 %v439
  %510 = vmatpush.msra.mxu0 %v438
  %511 = vmatpush.msra.mxu0 %v437
  %512 = vmatpush.msra.mxu0 %v436
  %513 = vmatmul.f32.gmra.mxu0 %v388
  %v514 = vpop.f32.mrf.mxu0
  %v515 = vadd.f32 %v486, %v514
  %516 = vmatmul.f32.gmra.mxu0 %v389
  %v517 = vpop.f32.mrf.mxu0
  %v518 = vadd.f32 %v489, %v517
  %519 = vmatmul.f32.gmra.mxu0 %v390
  %v520 = vpop.f32.mrf.mxu0
  %v521 = vadd.f32 %v492, %v520
  %522 = vmatmul.f32.gmra.mxu0 %v391
  %v523 = vpop.f32.mrf.mxu0
  %v524 = vadd.f32 %v495, %v523
  %525 = vdwg.mxu0
  %526 = vmatpush.msra.mxu0 %v467
  %527 = vmatpush.msra.mxu0 %v466
  %528 = vmatpush.msra.mxu0 %v465
  %529 = vmatpush.msra.mxu0 %v464
  %530 = vmatpush.msra.mxu0 %v463
  %531 = vmatpush.msra.mxu0 %v462
  %532 = vmatpush.msra.mxu0 %v461
  %533 = vmatpush.msra.mxu0 %v460
  %534 = vmatpush.msra.mxu0 %v459
  %535 = vmatpush.msra.mxu0 %v458
  %536 = vmatpush.msra.mxu0 %v457
  %537 = vmatpush.msra.mxu0 %v456
  %538 = vmatpush.msra.mxu0 %v455
  %539 = vmatpush.msra.mxu0 %v454
  %540 = vmatpush.msra.mxu0 %v453
  %541 = vmatpush.msra.mxu0 %v452
  %542 = vmatmul.f32.gmra.mxu0 %v410
  %v543 = vpop.f32.mrf.mxu0
  %v544 = vadd.f32 %v515, %v543
  %545 = vmatmul.f32.gmra.mxu0 %v418
  %v546 = vpop.f32.mrf.mxu0
  %v547 = vadd.f32 %v518, %v546
  %548 = vmatmul.f32.gmra.mxu0 %v413
  %v549 = vpop.f32.mrf.mxu0
  %v550 = vadd.f32 %v521, %v549
  %551 = vmatmul.f32.gmra.mxu0 %v419
  %v552 = vpop.f32.mrf.mxu0
  %v553 = vadd.f32 %v524, %v552
  %554 = vdwg.mxu0
  %v555 = vmul.f32 %v544, %v544
  %v556 = vmul.f32 %v547, %v547
  %v557 = vmul.f32 %v550, %v550
  %v558 = vmul.f32 %v553, %v553
  %559 = vmatpush.msra.mxu0 0.0
  %560 = vmatpush.msra.mxu0 0.0
  %561 = vmatpush.msra.mxu0 0.0
  %562 = vmatpush.msra.mxu0 0.0
  %563 = vmatpush.msra.mxu0 0.0
  %564 = vmatpush.msra.mxu0 0.0
  %565 = vmatpush.msra.mxu0 0.0
  %566 = vmatpush.msra.mxu0 0.0
  %567 = vmatpush.msra.mxu0 0.0
  %568 = vmatpush.msra.mxu0 0.0
  %569 = vmatpush.msra.mxu0 0.0
  %570 = vmatpush.msra.mxu0 0.0
  %571 = vmatpush.msra.mxu0 %v553
  %572 = vmatpush.msra.mxu0 %v550
  %573 = vmatpush.msra.mxu0 %v547
  %574 = vmatpush.msra.mxu0 %v544
  %575 = vmatmul.f32.gmra.mxu0 %v240
  %v576 = vpop.f32.mrf.mxu0
  %v577 = vadd.f32 0.0, %v576
  %578 = vdwg.mxu0
  %579 = vmatpush.msra.mxu0 0.0
  %580 = vmatpush.msra.mxu0 0.0
  %581 = vmatpush.msra.mxu0 0.0
  %582 = vmatpush.msra.mxu0 0.0
  %583 = vmatpush.msra.mxu0 0.0
  %584 = vmatpush.msra.mxu0 0.0
  %585 = vmatpush.msra.mxu0 0.0
  %586 = vmatpush.msra.mxu0 0.0
  %587 = vmatpush.msra.mxu0 0.0
  %588 = vmatpush.msra.mxu0 0.0
  %589 = vmatpush.msra.mxu0 0.0
  %590 = vmatpush.msra.mxu0 0.0
  %591 = vmatpush.msra.mxu0 %v558
  %592 = vmatpush.msra.mxu0 %v557
  %593 = vmatpush.msra.mxu0 %v556
  %594 = vmatpush.msra.mxu0 %v555
  %595 = vmatmul.f32.gmra.mxu0 %v240
  %v596 = vpop.f32.mrf.mxu0
  %v597 = vadd.f32 0.0, %v596
  %598 = vdwg.mxu0
  %599 = vmatpush.msra.mxu0 %v51
  %600 = vmatpush.msra.mxu0 %v50
  %601 = vmatpush.msra.mxu0 %v49
  %602 = vmatpush.msra.mxu0 %v48
  %603 = vmatpush.msra.mxu0 %v47
  %604 = vmatpush.msra.mxu0 %v46
  %605 = vmatpush.msra.mxu0 %v45
  %606 = vmatpush.msra.mxu0 %v44
  %607 = vmatpush.msra.mxu0 %v43
  %608 = vmatpush.msra.mxu0 %v42
  %609 = vmatpush.msra.mxu0 %v41
  %610 = vmatpush.msra.mxu0 %v40
  %611 = vmatpush.msra.mxu0 %v39
  %612 = vmatpush.msra.mxu0 %v38
  %613 = vmatpush.msra.mxu0 %v37
  %614 = vmatpush.msra.mxu0 %v36
  %615 = vmatmul.f32.gmra.mxu0 %v577
  %v616 = vpop.f32.mrf.mxu0
  %v617 = vadd.f32 0.0, %v616
  %618 = vdwg.mxu0
  %619 = vmatpush.msra.mxu0 %v67
  %620 = vmatpush.msra.mxu0 %v66
  %621 = vmatpush.msra.mxu0 %v65
  %622 = vmatpush.msra.mxu0 %v64
  %623 = vmatpush.msra.mxu0 %v63
  %624 = vmatpush.msra.mxu0 %v62
  %625 = vmatpush.msra.mxu0 %v61
  %626 = vmatpush.msra.mxu0 %v60
  %627 = vmatpush.msra.mxu0 %v59
  %628 = vmatpush.msra.mxu0 %v58
  %629 = vmatpush.msra.mxu0 %v57
  %630 = vmatpush.msra.mxu0 %v56
  %631 = vmatpush.msra.mxu0 %v55
  %632 = vmatpush.msra.mxu0 %v54
  %633 = vmatpush.msra.mxu0 %v53
  %634 = vmatpush.msra.mxu0 %v52
  %635 = vmatmul.f32.gmra.mxu0 %v597
  %v636 = vpop.f32.mrf.mxu0
  %v637 = vadd.f32 %v617, %v636
  %638 = vdwg.mxu0
  %v639 = vmul.f32 %v637, 0.001953125
  %v640 = vmul.f32 %v639, %v639
  %642 = vrot.lane.b32.xlu0 %v640, 8
  %v643 = vpop.permute.xlu0 %642
  %v645 = vsub.f32 %v639, %v643
  %v646 = vmax.f32 %v645, 0.0
  %v647 = vld [vmem:[%s5] sm:$0x1]
  %v648 = vadd.f32 %v646, 1e-05
  %v649 = vrsqrt.pop %v648
  %v650 = vmul.f32 %v649, %v648
  %v651 = vmul.f32 %v650, %v649
  %v652 = vmul.f32 0.5, %v651
  %v653 = vsub.f32 1.5, %v652
  %v654 = vmul.f32 %v649, %v653
  %vm655 = vweird.f32 %v648
  %vm656 = vweird.f32 %v649
  %vm657 = vmor %vm655, %vm656
  %v658 = vsel %vm657, %v649, %v654
  %660 = vrot.lane.b32.xlu0 %v658, 120
  %v661 = vpop.permute.xlu0 %660
  %v663 = vmul.f32 %v647, %v661
  %v664 = vld [vmem:[%s6] sm:$0x1]
  %v665 = vmul.f32 %v639, %v663
  %v666 = vsub.f32 %v664, %v665
  %v668 = vperm.slane %v666, 0
  %v670 = vsel %vm73, %v663, %v668
  %v672 = vsel %vm354, %v670, 0
  %674 = vmatpush.msra.mxu0 0.0
  %675 = vmatpush.msra.mxu0 0.0
  %676 = vmatpush.msra.mxu0 0.0
  %677 = vmatpush.msra.mxu0 0.0
  %678 = vmatpush.msra.mxu0 0.0
  %679 = vmatpush.msra.mxu0 0.0
  %680 = vmatpush.msra.mxu0 0.0
  %681 = vmatpush.msra.mxu0 0.0
  %682 = vmatpush.msra.mxu0 0.0
  %683 = vmatpush.msra.mxu0 0.0
  %684 = vmatpush.msra.mxu0 0.0
  %685 = vmatpush.msra.mxu0 0.0
  %686 = vmatpush.msra.mxu0 0.0
  %687 = vmatpush.msra.mxu0 0.0
  %688 = vmatpush.msra.mxu0 0.0
  %689 = vmatpush.msra.mxu0 %v68
  %690 = vmatmul.f32.gmra.mxu0 %v672
  %v691 = vpop.f32.mrf.mxu0
  %v692 = vadd.f32 0.0, %v691
  %693 = vdwg.mxu0
  %v694 = vperm.slane %v692, 0
  %v695 = vmul.f32 %v544, %v694
  %v696 = vmul.f32 %v547, %v694
  %v697 = vmul.f32 %v550, %v694
  %v698 = vmul.f32 %v553, %v694
  %v699 = vperm.slane %v692, 1
  %v700 = vadd.f32 %v695, %v699
  %v701 = vadd.f32 %v696, %v699
  %v702 = vadd.f32 %v697, %v699
  %v703 = vadd.f32 %v698, %v699
  %v704 = vadd.f32 %v700, %v32
  %v705 = vadd.f32 %v701, %v33
  %v706 = vadd.f32 %v702, %v34
  %v707 = vadd.f32 %v703, %v35
  %v708 = vmax.f32 %v704, 0.0
  %v709 = vmax.f32 %v705, 0.0
  %v710 = vmax.f32 %v706, 0.0
  %v711 = vmax.f32 %v707, 0.0
  %712 = vst [vmem:[%s9] sm:$0xff] %v708
  %713 = vst [vmem:[%s9 + $0x8] sm:$0xff] %v709
  %714 = vst [vmem:[%s9 + $0x10] sm:$0xff] %v710
  %715 = vst [vmem:[%s9 + $0x18] sm:$0xff] %v711
  // Predicated region
  $region38: #{basic_block_forward_nchw.1} parent=0 // pred_check
    _
  $region39: #{basic_block_forward_nchw.1} parent=0 // pred_check_branch
    %717 = sbr.rel (0) target = $region41
  $region40: #{basic_block_forward_nchw.1} parent=0 // pred_region
    _
  $region41: #{basic_block_forward_nchw.1} parent=0 // pred_fallthru
    _
  // Predicated region
  $region42: #{basic_block_forward_nchw.1} parent=0 // pred_check
    _
  $region43: #{basic_block_forward_nchw.1} parent=0 // pred_check_branch
    %719 = sbr.rel (0) target = $region45
  $region44: #{basic_block_forward_nchw.1} parent=0 // pred_region
    _
  $region45: #{basic_block_forward_nchw.1} parent=0 // pred_fallthru
    _

</llo_original>
